<compile_context>
chip_gen: v5e
topology: v5e:2x2
jax: 0.10.0
libtpu: 0.0.40
codegen_flags: <defaults>
</compile_context>

<pallas_src>
import jax
import jax.numpy as jnp
from jax.experimental import pallas as pl
from jax.experimental.pallas import tpu as pltpu


# --------------------------------------------------------------------------- #
# Kernel
# --------------------------------------------------------------------------- #
def _risk_kernel(scal_ref,   # SMEM (6,)      : t1l, t1h, t2l, t2h, b2, sum(W2r)
                 in_ref,     # VMEM (D+3, TB) : [ones; other^T; f1; f2]
                 w1_ref,     # VMEM (H, D+1)  : [b1 | W1]  (fc1 bias folded in)
                 w2x_ref,    # VMEM (1, H)    : fc2 weight row, x branch
                 out_ref):   # VMEM (1, 1, TB)
    t1_low = scal_ref[0]
    t1_high = scal_ref[1]
    t2_low = scal_ref[2]
    t2_high = scal_ref[3]
    b2 = scal_ref[4]
    w2r_sum = scal_ref[5]

    d_aug = w1_ref.shape[1]                    # D + 1 (ones row + D feature rows)
    xin = in_ref[0:d_aug, :]                   # (D+1, TB)
    f1 = in_ref[d_aug:d_aug + 1, :]            # (1, TB)  lane-dense
    f2 = in_ref[d_aug + 1:d_aug + 2, :]        # (1, TB)

    # risk = 1 - ((f1 in [t1l,t1h]) & (f2 in [t2l,t2h]))   -> (1, TB), lane-dense
    within = jnp.logical_and(
        jnp.logical_and(f1 >= t1_low, f1 <= t1_high),
        jnp.logical_and(f2 >= t2_low, f2 <= t2_high))
    risk = 1.0 - within.astype(jnp.float32)

    # fc1 + bias as one MXU matmul on the augmented weight (N = TB lanes wide).
    xT = jnp.dot(w1_ref[...], xin, preferred_element_type=jnp.float32)   # (H, TB)
    xT = jnp.maximum(xT, 0.0)

    # fc2: x-branch as a tiny MXU dot (already lane-dense), risk branch is the
    # algebraic fold risk_expanded @ W2r == risk * sum(W2r).
    logit = jnp.dot(w2x_ref[...], xT, preferred_element_type=jnp.float32)  # (1, TB)
    logit = logit + risk * w2r_sum + b2

    out_ref[0] = jax.nn.sigmoid(logit)         # full-width lane-dense store


# --------------------------------------------------------------------------- #
# Parameter repacking (one-time, outside the per-call hot path)
# --------------------------------------------------------------------------- #
def prepare_params(params):
    """Repack torch-layout parameters for the lane-dense kernel."""
    w1 = jnp.asarray(params["fc1_w"], jnp.float32)            # (H, D) torch layout
    b1 = jnp.asarray(params["fc1_b"], jnp.float32)            # (H,)
    H, _ = w1.shape
    w1aug = jnp.concatenate([b1[:, None], w1], axis=1)        # (H, D+1): bias as col 0

    w2 = jnp.asarray(params["fc2_w"], jnp.float32).reshape(-1)  # (2H,)
    w2x = w2[:H][None, :]                                        # (1, H) x branch
    w2r_sum = jnp.sum(w2[H:])                                    # risk branch folded
    b2 = jnp.asarray(params["fc2_b"], jnp.float32).reshape(())

    scalars = jnp.stack([
        jnp.asarray(params["threshold1_low"], jnp.float32),
        jnp.asarray(params["threshold1_high"], jnp.float32),
        jnp.asarray(params["threshold2_low"], jnp.float32),
        jnp.asarray(params["threshold2_high"], jnp.float32),
        b2,
        w2r_sum,
    ])                                                           # (6,) f32 -> SMEM
    # TODO(synk): optionally keep w1aug / the activation slab in bf16 (cast once
    # here, never per call) for ~1.8x less HBM traffic on v6e/v7x.
    return {"scalars": scalars, "w1aug": w1aug, "w2x": w2x}


# --------------------------------------------------------------------------- #
# Tiling helper
# --------------------------------------------------------------------------- #
def _round_up(x, m):
    return (x + m - 1) // m * m


def _choose_tile(B, slab_rows):
    """Batch-tile (lane) width.

    - B <= 128: one full block (block == full array dim, no 128-divisibility
      constraint).
    - otherwise a multiple of 128 sized so the input slab block is ~2 MiB
      (measured sweet spot: >=85% of HBM roofline), additionally capped at
      ceil(B/2) rounded to 128 so the grid has >= 2 steps and can shard
      across the two v7x TensorCores.  Double-buffered footprint is a few
      MiB, far below the 32 MiB default scoped VMEM on v5e/v6e/v7x.
    """
    if B <= 128:
        return B
    bytes_per_col = slab_rows * 4
    target = max(128, ((2 << 20) // bytes_per_col) // 128 * 128)   # ~2 MiB slab block
    half = _round_up(pl.cdiv(B, 2), 128)                           # >= 2 grid steps
    return min(target, half, 32768)


# --------------------------------------------------------------------------- #
# Forward wrapper
# --------------------------------------------------------------------------- #
@jax.jit
def risk_classification_forward(feature1, feature2, other_features, prep):
    """feature1/feature2: (B,) or (B,1); other_features: (B, D). Returns (B, 1)."""
    f1 = feature1.reshape(-1).astype(jnp.float32)
    f2 = feature2.reshape(-1).astype(jnp.float32)
    other = other_features.astype(jnp.float32)
    B, D = other.shape
    H = prep["w1aug"].shape[0]

    # Lane-dense input slab (batch on the lane axis):
    #   row 0         : ones            (bias column of the augmented fc1 matmul)
    #   rows 1..D     : other_features^T
    #   rows D+1, D+2 : feature1, feature2
    # TODO(synk): in production, have the caller store inputs directly in this
    # (D+3, B) layout so this wrapper-side transpose/concat HBM pass disappears.
    slab = jnp.concatenate(
        [jnp.ones((1, B), jnp.float32), other.T, f1[None, :], f2[None, :]],
        axis=0)                                                     # (D+3, B)

    TB = _choose_tile(B, D + 3)
    G = pl.cdiv(B, TB)

    out = pl.pallas_call(
        _risk_kernel,
        out_shape=jax.ShapeDtypeStruct((G, 1, TB), jnp.float32),
        grid=(G,),
        in_specs=[
            pl.BlockSpec(memory_space=pltpu.MemorySpace.SMEM),      # scalars
            pl.BlockSpec((D + 3, TB), lambda i: (0, i)),            # input slab
            pl.BlockSpec((H, D + 1), lambda i: (0, 0)),             # w1aug (replicated)
            pl.BlockSpec((1, H), lambda i: (0, 0)),                 # w2x row (replicated)
        ],
        out_specs=pl.BlockSpec((1, 1, TB), lambda i: (i, 0, 0)),
        compiler_params=pltpu.CompilerParams(
            dimension_semantics=("parallel",)),                     # shards across TCs on v7x
    )(prep["scalars"], slab, prep["w1aug"], prep["w2x"])

    # Drop the lane padding of the last (partial) tile and restore (B, 1).
    return out.reshape(G * TB)[:B].reshape(B, 1)


# --------------------------------------------------------------------------- #
# Init + pure-JAX reference
# --------------------------------------------------------------------------- #
def init_params(key, other_features_dim, hidden_dim):
    """Torch-layout params mimicking nn.Linear init (uniform +/- 1/sqrt(fan_in))."""
    k1, k2, k3, k4 = jax.random.split(key, 4)
    lim1 = 1.0 / jnp.sqrt(other_features_dim)
    lim2 = 1.0 / jnp.sqrt(2 * hidden_dim)
    return {
        "threshold1_low": jnp.float32(0.0),
        "threshold1_high": jnp.float32(1.0),
        "threshold2_low": jnp.float32(0.0),
        "threshold2_high": jnp.float32(1.0),
        "fc1_w": jax.random.uniform(k1, (hidden_dim, other_features_dim),
                                    jnp.float32, -lim1, lim1),
        "fc1_b": jax.random.uniform(k2, (hidden_dim,), jnp.float32, -lim1, lim1),
        "fc2_w": jax.random.uniform(k3, (1, 2 * hidden_dim),
                                    jnp.float32, -lim2, lim2),
        "fc2_b": jax.random.uniform(k4, (1,), jnp.float32, -lim2, lim2),
    }


def _reference_forward(feature1, feature2, other_features, params):
    """Pure-JAX reference matching the PyTorch forward exactly."""
    f1 = feature1.reshape(-1)
    f2 = feature2.reshape(-1)
    w1 = (f1 >= params["threshold1_low"]) & (f1 <= params["threshold1_high"])
    w2 = (f2 >= params["threshold2_low"]) & (f2 <= params["threshold2_high"])
    risk = (1.0 - (w1 & w2).astype(jnp.float32)).reshape(-1, 1)
    x = jax.nn.relu(other_features @ params["fc1_w"].T + params["fc1_b"])
    risk_exp = jnp.broadcast_to(risk, x.shape)
    combined = jnp.concatenate([x, risk_exp], axis=1)
    return jax.nn.sigmoid(combined @ params["fc2_w"].T + params["fc2_b"])


# --------------------------------------------------------------------------- #
# Demo / correctness check
# --------------------------------------------------------------------------- #
if __name__ == "__main__":
    D, H = 16, 32
    key = jax.random.PRNGKey(0)
    kp, kdata = jax.random.split(key)

    params = init_params(kp, other_features_dim=D, hidden_dim=H)
    prep = prepare_params(params)   # one-time repack (outside the hot path)

    # Check both the single-block path (B=8) and the multi-tile path with a
    # partial final block (B=300, not a multiple of the 128-lane tile).
    for B in (8, 300):
        kf1, kf2, ko, kdata = jax.random.split(kdata, 4)
        feature1 = jax.random.uniform(kf1, (B,), jnp.float32, -0.5, 1.5)
        feature2 = jax.random.uniform(kf2, (B,), jnp.float32, -0.5, 1.5)
        other_features = jax.random.normal(ko, (B, D), jnp.float32)

        out = risk_classification_forward(feature1, feature2, other_features, prep)
        out = jax.block_until_ready(out)

        ref = _reference_forward(feature1, feature2, other_features, params)
        assert out.shape == (B, 1)
        assert jnp.allclose(out, ref, atol=1e-5, rtol=1e-5)

    print("KERNEL_OK")
</pallas_src>

<mosaic_0001>
module attributes {stable_mosaic.version = 11 : i64} {
  func.func @_risk_kernel(%arg0: i32, %arg1: memref<6xf32, #tpu.memory_space<smem>>, %arg2: memref<19x8xf32, #tpu.memory_space<vmem>>, %arg3: memref<32x17xf32, #tpu.memory_space<vmem>>, %arg4: memref<1x32xf32, #tpu.memory_space<vmem>>, %arg5: memref<1x1x8xf32, #tpu.memory_space<vmem>>) attributes {dimension_semantics = [#tpu.dimension_semantics<parallel>], iteration_bounds = array<i64: 1>, scalar_prefetch = 0 : i64, scratch_operands = 0 : i64, tpu.core_type = #tpu.core_type<tc>, window_params = [{transform_indices = @transform_0, window_bounds = array<i64: 6>}, {transform_indices = @transform_1, window_bounds = array<i64: 19, 8>}, {pipeline_mode = #tpu.pipeline_mode<synchronous>, transform_indices = @transform_2, window_bounds = array<i64: 32, 17>}, {pipeline_mode = #tpu.pipeline_mode<synchronous>, transform_indices = @transform_3, window_bounds = array<i64: 1, 32>}, {transform_indices = @transform_4, window_bounds = array<i64: 1, 1, 8>}]} {
    %c0 = arith.constant 0 : index
    %0 = memref.load %arg1[%c0] : memref<6xf32, #tpu.memory_space<smem>>
    %c1 = arith.constant 1 : index
    %1 = memref.load %arg1[%c1] : memref<6xf32, #tpu.memory_space<smem>>
    %c2 = arith.constant 2 : index
    %2 = memref.load %arg1[%c2] : memref<6xf32, #tpu.memory_space<smem>>
    %c3 = arith.constant 3 : index
    %3 = memref.load %arg1[%c3] : memref<6xf32, #tpu.memory_space<smem>>
    %c4 = arith.constant 4 : index
    %4 = memref.load %arg1[%c4] : memref<6xf32, #tpu.memory_space<smem>>
    %c5 = arith.constant 5 : index
    %5 = memref.load %arg1[%c5] : memref<6xf32, #tpu.memory_space<smem>>
    %c0_0 = arith.constant 0 : index
    %c0_1 = arith.constant 0 : index
    %6 = vector.load %arg2[%c0_0, %c0_1] : memref<19x8xf32, #tpu.memory_space<vmem>>, vector<17x8xf32>
    %c17 = arith.constant 17 : index
    %c0_2 = arith.constant 0 : index
    %7 = vector.load %arg2[%c17, %c0_2] : memref<19x8xf32, #tpu.memory_space<vmem>>, vector<1x8xf32>
    %c18 = arith.constant 18 : index
    %c0_3 = arith.constant 0 : index
    %8 = vector.load %arg2[%c18, %c0_3] : memref<19x8xf32, #tpu.memory_space<vmem>>, vector<1x8xf32>
    %9 = vector.broadcast %0 : f32 to vector<1x8xf32>
    %10 = arith.cmpf oge, %7, %9 : vector<1x8xf32>
    %11 = vector.broadcast %1 : f32 to vector<1x8xf32>
    %12 = arith.cmpf ole, %7, %11 : vector<1x8xf32>
    %13 = arith.andi %10, %12 : vector<1x8xi1>
    %14 = vector.broadcast %2 : f32 to vector<1x8xf32>
    %15 = arith.cmpf oge, %8, %14 : vector<1x8xf32>
    %16 = vector.broadcast %3 : f32 to vector<1x8xf32>
    %17 = arith.cmpf ole, %8, %16 : vector<1x8xf32>
    %18 = arith.andi %15, %17 : vector<1x8xi1>
    %19 = arith.andi %13, %18 : vector<1x8xi1>
    %20 = arith.extui %19 : vector<1x8xi1> to vector<1x8xi32>
    %21 = arith.sitofp %20 : vector<1x8xi32> to vector<1x8xf32>
    %cst = arith.constant 1.000000e+00 : f32
    %22 = vector.broadcast %cst : f32 to vector<1x8xf32>
    %23 = arith.subf %22, %21 : vector<1x8xf32>
    %c0_4 = arith.constant 0 : index
    %c0_5 = arith.constant 0 : index
    %24 = vector.load %arg3[%c0_4, %c0_5] : memref<32x17xf32, #tpu.memory_space<vmem>>, vector<32x17xf32>
    %cst_6 = arith.constant dense<0.000000e+00> : vector<32x8xf32>
    %25 = tpu.matmul %24, %6, %cst_6 {dimension_numbers = #tpu.dot_dimension_numbers<[1], [0], [0], [1], [0, 0, 1, 1], [], []>} : vector<32x17xf32>, vector<17x8xf32>, vector<32x8xf32> -> vector<32x8xf32>
    %cst_7 = arith.constant 0.000000e+00 : f32
    %26 = vector.broadcast %cst_7 : f32 to vector<32x8xf32>
    %27 = arith.maximumf %25, %26 : vector<32x8xf32>
    %c0_8 = arith.constant 0 : index
    %c0_9 = arith.constant 0 : index
    %28 = vector.load %arg4[%c0_8, %c0_9] : memref<1x32xf32, #tpu.memory_space<vmem>>, vector<1x32xf32>
    %cst_10 = arith.constant dense<0.000000e+00> : vector<1x8xf32>
    %29 = tpu.matmul %28, %27, %cst_10 {dimension_numbers = #tpu.dot_dimension_numbers<[1], [0], [0], [1], [0, 0, 1, 1], [], []>} : vector<1x32xf32>, vector<32x8xf32>, vector<1x8xf32> -> vector<1x8xf32>
    %30 = vector.broadcast %5 : f32 to vector<1x8xf32>
    %31 = arith.mulf %23, %30 : vector<1x8xf32>
    %32 = arith.addf %29, %31 : vector<1x8xf32>
    %33 = vector.broadcast %4 : f32 to vector<1x8xf32>
    %34 = arith.addf %32, %33 : vector<1x8xf32>
    %35 = arith.negf %34 : vector<1x8xf32>
    %36 = math.exp %35 : vector<1x8xf32>
    %cst_11 = arith.constant 1.000000e+00 : f32
    %37 = vector.broadcast %cst_11 : f32 to vector<1x8xf32>
    %38 = arith.addf %37, %36 : vector<1x8xf32>
    %39 = arith.divf %37, %38 : vector<1x8xf32>
    %c0_12 = arith.constant 0 : index
    %c0_13 = arith.constant 0 : index
    %c0_14 = arith.constant 0 : index
    %40 = vector.load %arg5[%c0_12, %c0_13, %c0_14] : memref<1x1x8xf32, #tpu.memory_space<vmem>>, vector<1x1x8xf32>
    %41 = vector.shape_cast %40 : vector<1x1x8xf32> to vector<1x8xf32>
    %42 = vector.shape_cast %39 : vector<1x8xf32> to vector<1x1x8xf32>
    tpu.vector_store %arg5[%c0_12, %c0_13, %c0_14], %42 {strides = array<i32>} : memref<1x1x8xf32, #tpu.memory_space<vmem>>, vector<1x1x8xf32>,
    return
  }
  func.func @transform_0(%arg0: i32) -> i32 {
    %c0_i32 = arith.constant 0 : i32
    %c0_i32_0 = arith.constant 0 : i32
    return %c0_i32 : i32
  }
  func.func @transform_1(%arg0: i32) -> (i32, i32) {
    %c0_i32 = arith.constant 0 : i32
    %c0_i32_0 = arith.constant 0 : i32
    return %c0_i32, %arg0 : i32, i32
  }
  func.func @transform_2(%arg0: i32) -> (i32, i32) {
    %c0_i32 = arith.constant 0 : i32
    %c0_i32_0 = arith.constant 0 : i32
    %c0_i32_1 = arith.constant 0 : i32
    return %c0_i32, %c0_i32_0 : i32, i32
  }
  func.func @transform_3(%arg0: i32) -> (i32, i32) {
    %c0_i32 = arith.constant 0 : i32
    %c0_i32_0 = arith.constant 0 : i32
    %c0_i32_1 = arith.constant 0 : i32
    return %c0_i32, %c0_i32_0 : i32, i32
  }
  func.func @transform_4(%arg0: i32) -> (i32, i32, i32) {
    %c0_i32 = arith.constant 0 : i32
    %c0_i32_0 = arith.constant 0 : i32
    %c0_i32_1 = arith.constant 0 : i32
    return %arg0, %c0_i32, %c0_i32_0 : i32, i32, i32
  }
}

</mosaic_0001>

<llo_original>
// kernel: risk_classification_forward.1
$region0: #{risk_classification_forward.1}
  #allocation0 [shape = 'u32[]', space=smem, size = 0x4, offset = 0x4, fixed_abs, tag = 'smem constant byte address 0x4 - core index']
  #allocation1 [shape = 'u32[72,128]{1,0:T(1,128)}', space=vmem, size = 0x9000, scoped, tag = 'internal scratch']
  %s0 = inlined_call_operand.vmem [shape: f32[6], index: 0, kind: input, shape index: {}]
  %s1 = inlined_call_operand.vmem [shape: f32[19,8], index: 1, kind: input, shape index: {}]
  %s2 = inlined_call_operand.vmem [shape: f32[32,17], index: 2, kind: input, shape index: {}]
  %s3 = inlined_call_operand.vmem [shape: f32[1,32], index: 3, kind: input, shape index: {}]
  %s4 = inlined_call_operand.hbm [shape: f32[1,1,8], index: 4, kind: output, shape index: {}]
  %s5 = sld [smem:[#allocation0]]
  $region30: #{risk_classification_forward.1} parent=0
    _
  %s7 = ssub.s32 1, %s5
  %s8 = scalar_select 0, %s7, %s5
  $region1: #{risk_classification_forward.1} parent=0
    #allocation2 [shape = 'u8[512]{0}', space=smem, size = 0x200, scoped, tag = 'input window, operand 0, single buffered']
    #allocation3 [shape = 's32[1]{0}', space=sflag, size = 0x4, scoped, tag = 'scoped memory for risk_classification_forward.1']
    #allocation4 [shape = 's32[1]{0}', space=sflag, size = 0x4, scoped, tag = 'scoped memory for risk_classification_forward.1']
    #allocation5 [shape = 'u8[512]{0}', space=vmem, size = 0x400, scoped, tag = 'output window, operand 0, single buffered']
    %9 = vsyncpa [#allocation4], 0
    %10 = vsyncpa [#allocation3], 0
    // Predicated region
    $region2: #{risk_classification_forward.1} parent=1 // pred_check
      _
    $region3: #{risk_classification_forward.1} parent=1 // pred_check_branch
      %12 = sbr.rel (0) target = $region5
    $region4: #{risk_classification_forward.1} parent=1 // pred_region
      %14 = vsyncadd [#allocation4], 0
      %s16 = sshll.u32 %s0, 4
      %s17 = int_to_ptr.vmem [resolvable:$true] %s16
      %19 = dma.vmem_to_smem %s17, 16, [#allocation2], [#allocation4]
    $region5: #{risk_classification_forward.1} parent=1 // pred_fallthru
      _
    // Predicated region
    $region6: #{risk_classification_forward.1} parent=1 // pred_check
      _
    $region7: #{risk_classification_forward.1} parent=1 // pred_check_branch
      %21 = sbr.rel (0) target = $region9
    $region8: #{risk_classification_forward.1} parent=1 // pred_region
      _
    $region9: #{risk_classification_forward.1} parent=1 // pred_fallthru
      _
    // Predicated region
    $region10: #{risk_classification_forward.1} parent=1 // pred_check
      _
    $region11: #{risk_classification_forward.1} parent=1 // pred_check_branch
      %23 = sbr.rel (0) target = $region13
    $region12: #{risk_classification_forward.1} parent=1 // pred_region
      _
    $region13: #{risk_classification_forward.1} parent=1 // pred_fallthru
      _
    // Predicated region
    $region14: #{risk_classification_forward.1} parent=1 // pred_check
      _
    $region15: #{risk_classification_forward.1} parent=1 // pred_check_branch
      %25 = sbr.rel (0) target = $region17
    $region16: #{risk_classification_forward.1} parent=1 // pred_region
      _
    $region17: #{risk_classification_forward.1} parent=1 // pred_fallthru
      _
    // Predicated region
    $region18: #{risk_classification_forward.1} parent=1 // pred_check
      _
    $region19: #{risk_classification_forward.1} parent=1 // pred_check_branch
      %27 = sbr.rel (0) target = $region21
    $region20: #{risk_classification_forward.1} parent=1 // pred_region
      %29 = dma.done [#allocation4], 16
    $region21: #{risk_classification_forward.1} parent=1 // pred_fallthru
      _
    %30 = sfence
    %s31 = sld [smem:[#allocation2]]
    %s32 = sld [smem:[#allocation2 + $0x1]]
    %s33 = sld [smem:[#allocation2 + $0x2]]
    %s34 = sld [smem:[#allocation2 + $0x3]]
    %s35 = sld [smem:[#allocation2 + $0x4]]
    %s36 = sld [smem:[#allocation2 + $0x5]]
    %v37 = vld [vmem:[%s1] sm:$0xff]
    %v38 = vld [vmem:[%s1 + $0x8] sm:$0xff]
    %v39 = vld [vmem:[%s1 + $0x10] sm:$0x1]
    %v40 = vld [vmem:[%s1 + $0x11] sm:$0x1]
    %v41 = vld [vmem:[%s1 + $0x12] sm:$0x1]
    %v42 = vstv %s31
    %vm43 = vcmp.ge.f32.partialorder %v40, %v42
    %v44 = vstv %s32
    %vm45 = vcmp.le.f32.partialorder %v40, %v44
    %vm46 = vmand %vm43, %vm45
    %v47 = vstv %s33
    %vm48 = vcmp.ge.f32.partialorder %v41, %v47
    %v49 = vstv %s34
    %vm50 = vcmp.le.f32.partialorder %v41, %v49
    %vm51 = vmand %vm48, %vm50
    %vm52 = vmand %vm46, %vm51
    %v53 = vsel %vm52, 1, 0
    %v54 = vcvt.s32.f32 %v53
    %v55 = vsub.f32 1.0, %v54
    %v56 = vld [vmem:[%s2] sm:$0xff]
    %v57 = vld [vmem:[%s2 + $0x8] sm:$0xff]
    %v58 = vld [vmem:[%s2 + $0x10] sm:$0xff]
    %v59 = vld [vmem:[%s2 + $0x18] sm:$0xff]
    %vm60 = vcmask 138240
    %v62 = vsel %vm60, %v56, 0
    %v65 = vsel %vm60, %v57, 0
    %v68 = vsel %vm60, %v58, 0
    %v71 = vsel %vm60, %v59, 0
    %vm73 = vcmask 1040384
    %v75 = vsel %vm73, %v39, 0
    %77 = vmatpush.msra.mxu0 0.0
    %78 = vmatpush.msra.mxu0 0.0
    %79 = vmatpush.msra.mxu0 0.0
    %80 = vmatpush.msra.mxu0 0.0
    %81 = vmatpush.msra.mxu0 0.0
    %82 = vmatpush.msra.mxu0 0.0
    %83 = vmatpush.msra.mxu0 0.0
    %84 = vmatpush.msra.mxu0 0.0
    %85 = vmatpush.msra.mxu0 0.0
    %86 = vmatpush.msra.mxu0 0.0
    %87 = vmatpush.msra.mxu0 0.0
    %88 = vmatpush.msra.mxu0 0.0
    %89 = vmatpush.msra.mxu0 0.0
    %90 = vmatpush.msra.mxu0 %v75
    %91 = vmatpush.msra.mxu0 %v38
    %92 = vmatpush.msra.mxu0 %v37
    %93 = vmatmul.f32.gmra.mxu0 %v62
    %v94 = vpop.f32.mrf.mxu0
    %v95 = vadd.f32 0.0, %v94
    %96 = vmatmul.f32.gmra.mxu0 %v65
    %v97 = vpop.f32.mrf.mxu0
    %v98 = vadd.f32 0.0, %v97
    %99 = vmatmul.f32.gmra.mxu0 %v68
    %v100 = vpop.f32.mrf.mxu0
    %v101 = vadd.f32 0.0, %v100
    %102 = vmatmul.f32.gmra.mxu0 %v71
    %v103 = vpop.f32.mrf.mxu0
    %v104 = vadd.f32 0.0, %v103
    %105 = vdwg.mxu0
    %v106 = vmax.f32 %v95, 0.0
    %v107 = vmax.f32 %v98, 0.0
    %v108 = vmax.f32 %v101, 0.0
    %v109 = vmax.f32 %v104, 0.0
    %v110 = vld [vmem:[%s3] sm:$0x1]
    %v111 = vstv %s36
    %v112 = vmul.f32 %v55, %v111
    %vm113 = vcmask 261120
    %v115 = vsel %vm113, %v110, 0
    %117 = vmatpush.msra.mxu0 0.0
    %118 = vmatpush.msra.mxu0 0.0
    %119 = vmatpush.msra.mxu0 0.0
    %120 = vmatpush.msra.mxu0 0.0
    %121 = vmatpush.msra.mxu0 0.0
    %122 = vmatpush.msra.mxu0 0.0
    %123 = vmatpush.msra.mxu0 0.0
    %124 = vmatpush.msra.mxu0 0.0
    %125 = vmatpush.msra.mxu0 0.0
    %126 = vmatpush.msra.mxu0 0.0
    %127 = vmatpush.msra.mxu0 0.0
    %128 = vmatpush.msra.mxu0 0.0
    %129 = vmatpush.msra.mxu0 %v109
    %130 = vmatpush.msra.mxu0 %v108
    %131 = vmatpush.msra.mxu0 %v107
    %132 = vmatpush.msra.mxu0 %v106
    %133 = vmatmul.f32.gmra.mxu0 %v115
    %v134 = vpop.f32.mrf.mxu0
    %v135 = vadd.f32 %v112, %v134
    %136 = vdwg.mxu0
    %v137 = vstv %s35
    %v138 = vadd.f32 %v135, %v137
    %v139 = vxor.u32 %v138, 2147483648
    %v140 = vmul.f32 %v139, 1.442695
    %v141 = vpow.pop %v140
    %v142 = vadd.f32 %v141, 1.0
    %v143 = vrcp.pop %v142
    %v144 = vmul.f32 %v142, %v143
    %v145 = vsub.f32 1.0, %v144
    %v146 = vmul.f32 %v143, %v145
    %v147 = vadd.f32 %v143, %v146
    %vm148 = vweird.f32 %v142
    %vm149 = vweird.f32 %v143
    %vm150 = vmor %vm148, %vm149
    %v151 = vsel %vm150, %v143, %v147
    %v152 = vand.u32 2147483647, %v142
    %vm153 = vcmp.eq.f32.partialorder %v152, 8.507059e+37
    %v154 = vand.u32 %v142, 2147483648
    %v155 = vor.u32 1.1754944e-38, %v154
    %v156 = vsel %vm153, %v155, %v151
    %v157 = vmul.f32 1.0, %v156
    %vm158 = vcmask 57344
    %159 = vst.msk [vmem:[#allocation5] sm:$0x1] %vm158, %v157
    // Predicated region
    $region22: #{risk_classification_forward.1} parent=1 // pred_check
      _
    $region23: #{risk_classification_forward.1} parent=1 // pred_check_branch
      %161 = sbr.rel (0) target = $region25
    $region24: #{risk_classification_forward.1} parent=1 // pred_region
      %163 = vsyncadd [#allocation3], 0
      %s165 = sshll.u32 [#allocation5], 4
      %s166 = int_to_ptr.vmem [resolvable:$true] %s165
      %s167 = sshll.u32 %s4, 4
      %s168 = int_to_ptr.hbm [resolvable:$true] %s167
      %170 = dma.vmem_to_hbm [thread:$0]  %s166, 16, %s168, [#allocation3]
    $region25: #{risk_classification_forward.1} parent=1 // pred_fallthru
      _
    // Predicated region
    $region26: #{risk_classification_forward.1} parent=1 // pred_check
      _
    $region27: #{risk_classification_forward.1} parent=1 // pred_check_branch
      %172 = sbr.rel (0) target = $region29
    $region28: #{risk_classification_forward.1} parent=1 // pred_region
      %174 = dma.done [#allocation3], 16
    $region29: #{risk_classification_forward.1} parent=1 // pred_fallthru
      _
    %175 = vsyncpa [#allocation3], 1
    %176 = vsyncpa [#allocation4], 1

</llo_original>
